<compile_context>
chip_gen: v5e
topology: v5e:2x2
jax: 0.10.0
libtpu: 0.0.40
codegen_flags: <defaults>
</compile_context>

<pallas_src>
import jax
import jax.numpy as jnp
from jax.experimental import pallas as pl
from jax.experimental.pallas import tpu as pltpu


# ----------------------------------------------------------------------------
# Kernel
# ----------------------------------------------------------------------------
def _unshuffle_conv3x3_kernel(x_ref, top_ref, bot_ref, w_ref, b_ref, o_ref,
                              halo_ref):
    # x_ref   : (1, TH, Wo, C4)     body tile of the unshuffled NHWC input
    # top_ref : (1, 1, Wo, C4)      row  t*TH - 1 (clamped; zeroed at t == 0)
    # bot_ref : (1, 1, Wo, C4)      row (t+1)*TH  (clamped; zeroed at t == last)
    # w_ref   : (9, C4, Coutp)      per-tap weights, tap index = ki*3 + kj
    # b_ref   : (1, 1, Coutp)       bias (f32)
    # o_ref   : (1, TH, Wo, Coutp)  output tile
    # halo_ref: (2, Wo, C4)         scratch: [0]=top halo row, [1]=bottom
    t = pl.program_id(1)
    nt = pl.num_programs(1)
    _, th, wo, c4 = x_ref.shape

    # Halo rows; zero them where they fall outside the image (= conv padding).
    halo_ref[pl.ds(0, 1)] = top_ref[0]
    halo_ref[pl.ds(1, 1)] = bot_ref[0]

    @pl.when(t == 0)
    def _():
        halo_ref[pl.ds(0, 1)] = jnp.zeros((1, wo, c4), halo_ref.dtype)

    @pl.when(t == nt - 1)
    def _():
        halo_ref[pl.ds(1, 1)] = jnp.zeros((1, wo, c4), halo_ref.dtype)

    x = x_ref[0]                               # (TH, Wo, C4)
    top = halo_ref[pl.ds(0, 1)]                # (1, Wo, C4)
    bot = halo_ref[pl.ds(1, 1)]

    # Row slabs for the three kernel-row taps (input rows i-1, i, i+1).
    if th > 1:
        r_up = jnp.concatenate([top, x[:th - 1]], axis=0)
        r_dn = jnp.concatenate([x[1:], bot], axis=0)
    else:
        r_up, r_dn = top, bot
    rows = (r_up, x, r_dn)

    zcol = jnp.zeros((th, 1, c4), x.dtype)
    dn = (((2,), (0,)), ((), ()))              # contract C4 with weight rows

    acc = b_ref[...].astype(jnp.float32)       # (1,1,Coutp), broadcasts below
    for ki in range(3):
        r = rows[ki]
        if wo > 1:
            cols = (jnp.concatenate([zcol, r[:, :wo - 1]], axis=1),  # col j-1
                    r,                                               # col j
                    jnp.concatenate([r[:, 1:], zcol], axis=1))       # col j+1
        else:
            cols = (zcol, r, zcol)
        for kj in range(3):
            acc = acc + jax.lax.dot_general(
                cols[kj], w_ref[3 * ki + kj], dimension_numbers=dn,
                preferred_element_type=jnp.float32)

    o_ref[...] = acc[None].astype(o_ref.dtype)


# ----------------------------------------------------------------------------
# VMEM-aware tiling
# ----------------------------------------------------------------------------
def _vmem_capacity_bytes():
    try:
        return int(pltpu.get_tpu_info().vmem_capacity_bytes)
    except Exception:
        return 64 << 20                         # conservative (v7x-sized)


def _vmem_need(th, wo, c4, coutp, in_bytes, out_bytes):
    blk_in = th * wo * c4 * in_bytes            # body tile
    blk_out = th * wo * coutp * out_bytes       # output tile
    halos = 2 * wo * c4 * in_bytes              # two 1-row halo blocks
    weights = 9 * c4 * coutp * in_bytes + coutp * 4
    scratch = 2 * wo * c4 * in_bytes            # halo scratch
    live = th * wo * (2 * c4 * in_bytes + coutp * 4)   # shifted slabs + f32 acc
    # double-buffering on every pipelined operand:
    return 2 * (blk_in + blk_out + halos + weights) + scratch + live


def _pick_row_tile(n, ho, wo, c4, coutp, in_bytes, out_bytes, vmem_cap):
    """Largest divisor of Ho whose total VMEM footprint fits half of VMEM."""
    # NOTE: divisors only -- awkward (prime) Ho degrades to row_tile=1;
    # correct but slow.  Pad Ho upstream for such shapes.
    budget = vmem_cap // 2                      # headroom for compiler temps
    divisors = [d for d in range(1, ho + 1) if ho % d == 0]
    fits = [d for d in divisors
            if _vmem_need(d, wo, c4, coutp, in_bytes, out_bytes) <= budget]
    th = max(fits) if fits else 1
    # v7x has 2 TensorCores sharing the parallel grid axes: keep >= 2 steps.
    if n * (ho // th) < 2:
        smaller = [d for d in fits if ho // d >= 2]
        if smaller:
            th = max(smaller)
    return th, _vmem_need(th, wo, c4, coutp, in_bytes, out_bytes)


# ----------------------------------------------------------------------------
# Wrapper
# ----------------------------------------------------------------------------
def pixelshuffle2_downsampling(x_nchw, weight_oihw, bias, *, row_tile=None,
                               compute_dtype=None, pad_cout=None,
                               channels_last_out=False):
    """Forward pass matching the PyTorch module. Returns NCHW output
    (or NHWC if channels_last_out=True, skipping the final transpose)."""
    n, c, h, w = x_nchw.shape
    cout, cin4, kh, kw = weight_oihw.shape
    assert cin4 == 4 * c and kh == 3 and kw == 3
    assert h % 2 == 0 and w % 2 == 0, "PixelUnshuffle(2) needs even H, W"
    ho, wo = h // 2, w // 2
    c4 = cin4

    compute_dtype = jnp.dtype(x_nchw.dtype if compute_dtype is None
                              else compute_dtype)
    out_dtype = jnp.dtype(x_nchw.dtype)

    # Lane-dense output: optionally pad Cout to a multiple of the 128-lane
    # vreg width so the write-back is unmasked full-vreg stores.  Only worth
    # the extra HBM bytes when Cout is already a decent fraction of 128.
    if pad_cout is None:
        pad_cout = (cout % 128 != 0) and (cout >= 64)
    coutp = ((cout + 127) // 128) * 128 if pad_cout else cout

    # PixelUnshuffle(2) fused with NCHW -> NHWC in ONE XLA transpose pass.
    # Unshuffled channel index (last axis) is c*4 + di*2 + dj (PyTorch order).
    xu = x_nchw.reshape(n, c, ho, 2, wo, 2)
    xu = jnp.transpose(xu, (0, 2, 4, 1, 3, 5)).reshape(n, ho, wo, c4)
    xu = xu.astype(compute_dtype)

    # Per-tap weights (9, C4, Coutp): tap k = ki*3 + kj; every in-kernel
    # weight read is a full, aligned block.
    w3 = jnp.transpose(weight_oihw, (2, 3, 1, 0)).reshape(9, c4, cout)
    b2 = bias.astype(jnp.float32).reshape(1, 1, cout)
    if coutp != cout:
        w3 = jnp.pad(w3, ((0, 0), (0, 0), (0, coutp - cout)))
        b2 = jnp.pad(b2, ((0, 0), (0, 0), (0, coutp - cout)))
    w3 = w3.astype(compute_dtype)

    vmem_cap = _vmem_capacity_bytes()
    if row_tile is None:
        row_tile, vmem_need = _pick_row_tile(
            n, ho, wo, c4, coutp, compute_dtype.itemsize, out_dtype.itemsize,
            vmem_cap)
    else:
        vmem_need = _vmem_need(row_tile, wo, c4, coutp,
                               compute_dtype.itemsize, out_dtype.itemsize)
    assert ho % row_tile == 0, "row_tile must divide H//2"
    nt = ho // row_tile
    vmem_limit = min(int(vmem_cap * 0.9), max(2 * vmem_need, 32 << 20))

    out_nhwc = pl.pallas_call(
        _unshuffle_conv3x3_kernel,
        out_shape=jax.ShapeDtypeStruct((n, ho, wo, coutp), out_dtype),
        grid=(n, nt),
        in_specs=[
            pl.BlockSpec((1, row_tile, wo, c4), lambda b, t: (b, t, 0, 0)),
            # 1-row halos, prefetched through the normal pipeline (row index
            # clamped at the image borders; zeroed in-kernel there).
            pl.BlockSpec((1, 1, wo, c4),
                         lambda b, t: (b, jnp.maximum(t * row_tile - 1, 0),
                                       0, 0)),
            pl.BlockSpec((1, 1, wo, c4),
                         lambda b, t: (b, jnp.minimum((t + 1) * row_tile,
                                                      ho - 1), 0, 0)),
            pl.BlockSpec((9, c4, coutp), lambda b, t: (0, 0, 0)),
            pl.BlockSpec((1, 1, coutp), lambda b, t: (0, 0, 0)),
        ],
        out_specs=pl.BlockSpec((1, row_tile, wo, coutp),
                               lambda b, t: (b, t, 0, 0)),
        scratch_shapes=[pltpu.VMEM((2, wo, c4), compute_dtype)],
        compiler_params=pltpu.CompilerParams(
            dimension_semantics=("parallel", "parallel"),
            vmem_limit_bytes=vmem_limit),
    )(xu, xu, xu, w3, b2)

    if coutp != cout:
        out_nhwc = out_nhwc[..., :cout]
    if channels_last_out:
        return out_nhwc                        # skip the NCHW transpose pass
    return jnp.transpose(out_nhwc, (0, 3, 1, 2))


# ----------------------------------------------------------------------------
# Pure-JAX reference (independent of the kernel's layout choices)
# ----------------------------------------------------------------------------
def _pixel_unshuffle_2(x_nchw):
    n, c, h, w = x_nchw.shape
    x = x_nchw.reshape(n, c, h // 2, 2, w // 2, 2)
    x = jnp.transpose(x, (0, 1, 3, 5, 2, 4))
    return x.reshape(n, c * 4, h // 2, w // 2)


def _reference(x_nchw, weight_oihw, bias):
    xu = _pixel_unshuffle_2(x_nchw)
    out = jax.lax.conv_general_dilated(
        xu, weight_oihw, window_strides=(1, 1), padding=((1, 1), (1, 1)),
        dimension_numbers=("NCHW", "OIHW", "NCHW"))
    return out + bias.reshape(1, -1, 1, 1)


if __name__ == "__main__":
    key = jax.random.PRNGKey(0)
    kx, kw_, kb = jax.random.split(key, 3)

    N, C, H, W = 2, 4, 16, 16
    OUT_CH = 8

    x = jax.random.normal(kx, (N, C, H, W), dtype=jnp.float32)

    # Deterministic Conv2d-style init (uniform in +/- 1/sqrt(fan_in)).
    fan_in = 4 * C * 3 * 3
    bound = 1.0 / jnp.sqrt(jnp.float32(fan_in))
    weight = jax.random.uniform(kw_, (OUT_CH, 4 * C, 3, 3),
                                minval=-bound, maxval=bound, dtype=jnp.float32)
    bias = jax.random.uniform(kb, (OUT_CH,), minval=-bound, maxval=bound,
                              dtype=jnp.float32)

    ref = jax.block_until_ready(_reference(x, weight, bias))

    # f32 paths: auto tile (single row-tile, both halos zeroed) and an
    # explicit row_tile=4 exercising the pipelined halo blocks plus the
    # lane-padded (Cout -> 128) output path.
    for rt, pad in ((None, None), (4, True)):
        out = jax.block_until_ready(
            pixelshuffle2_downsampling(x, weight, bias, row_tile=rt,
                                       pad_cout=pad))
        assert out.shape == (N, OUT_CH, H // 2, W // 2), out.shape
        err = float(jnp.max(jnp.abs(out - ref)))
        assert jnp.allclose(out, ref, atol=1e-4, rtol=1e-4), err

    # bf16 operand / f32 accumulate path (v6e / v7x MXU-native; halves
    # HBM + VMEM traffic for this memory-bound op).
    out_bf16 = jax.block_until_ready(
        pixelshuffle2_downsampling(x, weight, bias, row_tile=4,
                                   compute_dtype=jnp.bfloat16))
    err = float(jnp.max(jnp.abs(out_bf16 - ref)))
    assert jnp.allclose(out_bf16, ref, atol=5e-2, rtol=5e-2), err

    print("KERNEL_OK")
</pallas_src>

<mosaic_0001>
module attributes {stable_mosaic.version = 11 : i64} {
  func.func @_unshuffle_conv3x3_kernel(%arg0: i32, %arg1: i32, %arg2: memref<1x8x8x16xf32, #tpu.memory_space<vmem>>, %arg3: memref<1x1x8x16xf32, #tpu.memory_space<vmem>>, %arg4: memref<1x1x8x16xf32, #tpu.memory_space<vmem>>, %arg5: memref<9x16x8xf32, #tpu.memory_space<vmem>>, %arg6: memref<1x1x8xf32, #tpu.memory_space<vmem>>, %arg7: memref<1x8x8x8xf32, #tpu.memory_space<vmem>>, %arg8: memref<2x8x16xf32, #tpu.memory_space<vmem>>) attributes {dimension_semantics = [#tpu.dimension_semantics<parallel>, #tpu.dimension_semantics<parallel>], iteration_bounds = array<i64: 2, 1>, scalar_prefetch = 0 : i64, scratch_operands = 1 : i64, tpu.core_type = #tpu.core_type<tc>, window_params = [{transform_indices = @transform_0, window_bounds = array<i64: 1, 8, 8, 16>}, {transform_indices = @transform_1, window_bounds = array<i64: 1, 1, 8, 16>}, {transform_indices = @transform_2, window_bounds = array<i64: 1, 1, 8, 16>}, {pipeline_mode = #tpu.pipeline_mode<synchronous>, transform_indices = @transform_3, window_bounds = array<i64: 9, 16, 8>}, {pipeline_mode = #tpu.pipeline_mode<synchronous>, transform_indices = @transform_4, window_bounds = array<i64: 1, 1, 8>}, {transform_indices = @transform_5, window_bounds = array<i64: 1, 8, 8, 8>}]} {
    %c0 = arith.constant 0 : index
    %c0_0 = arith.constant 0 : index
    %c0_1 = arith.constant 0 : index
    %c0_2 = arith.constant 0 : index
    %0 = vector.load %arg3[%c0, %c0_0, %c0_1, %c0_2] : memref<1x1x8x16xf32, #tpu.memory_space<vmem>>, vector<1x1x8x16xf32>
    %1 = vector.shape_cast %0 : vector<1x1x8x16xf32> to vector<1x8x16xf32>
    %c0_3 = arith.constant 0 : index
    %c0_4 = arith.constant 0 : index
    %c0_5 = arith.constant 0 : index
    %2 = vector.load %arg8[%c0_3, %c0_4, %c0_5] : memref<2x8x16xf32, #tpu.memory_space<vmem>>, vector<1x8x16xf32>
    tpu.vector_store %arg8[%c0_3, %c0_4, %c0_5], %1 {strides = array<i32>} : memref<2x8x16xf32, #tpu.memory_space<vmem>>, vector<1x8x16xf32>,
    %c0_6 = arith.constant 0 : index
    %c0_7 = arith.constant 0 : index
    %c0_8 = arith.constant 0 : index
    %c0_9 = arith.constant 0 : index
    %3 = vector.load %arg4[%c0_6, %c0_7, %c0_8, %c0_9] : memref<1x1x8x16xf32, #tpu.memory_space<vmem>>, vector<1x1x8x16xf32>
    %4 = vector.shape_cast %3 : vector<1x1x8x16xf32> to vector<1x8x16xf32>
    %c1 = arith.constant 1 : index
    %c0_10 = arith.constant 0 : index
    %c0_11 = arith.constant 0 : index
    %5 = vector.load %arg8[%c1, %c0_10, %c0_11] : memref<2x8x16xf32, #tpu.memory_space<vmem>>, vector<1x8x16xf32>
    tpu.vector_store %arg8[%c1, %c0_10, %c0_11], %4 {strides = array<i32>} : memref<2x8x16xf32, #tpu.memory_space<vmem>>, vector<1x8x16xf32>,
    %c0_i32 = arith.constant 0 : i32
    %6 = arith.cmpi eq, %arg1, %c0_i32 : i32
    %7 = arith.extui %6 : i1 to i32
    %c0_i32_12 = arith.constant 0 : i32
    %8 = arith.cmpi ne, %7, %c0_i32_12 : i32
    scf.if %8 {
      %cst_61 = arith.constant 0.000000e+00 : f32
      %73 = vector.broadcast %cst_61 : f32 to vector<1x8x16xf32>
      %c0_62 = arith.constant 0 : index
      %c0_63 = arith.constant 0 : index
      %c0_64 = arith.constant 0 : index
      %74 = vector.load %arg8[%c0_62, %c0_63, %c0_64] : memref<2x8x16xf32, #tpu.memory_space<vmem>>, vector<1x8x16xf32>
      tpu.vector_store %arg8[%c0_62, %c0_63, %c0_64], %73 {strides = array<i32>} : memref<2x8x16xf32, #tpu.memory_space<vmem>>, vector<1x8x16xf32>,
    } else {
    }
    %c0_i32_13 = arith.constant 0 : i32
    %9 = arith.cmpi eq, %arg1, %c0_i32_13 : i32
    %10 = arith.extui %9 : i1 to i32
    %c0_i32_14 = arith.constant 0 : i32
    %11 = arith.cmpi ne, %10, %c0_i32_14 : i32
    scf.if %11 {
      %cst_61 = arith.constant 0.000000e+00 : f32
      %73 = vector.broadcast %cst_61 : f32 to vector<1x8x16xf32>
      %c1_62 = arith.constant 1 : index
      %c0_63 = arith.constant 0 : index
      %c0_64 = arith.constant 0 : index
      %74 = vector.load %arg8[%c1_62, %c0_63, %c0_64] : memref<2x8x16xf32, #tpu.memory_space<vmem>>, vector<1x8x16xf32>
      tpu.vector_store %arg8[%c1_62, %c0_63, %c0_64], %73 {strides = array<i32>} : memref<2x8x16xf32, #tpu.memory_space<vmem>>, vector<1x8x16xf32>,
    } else {
    }
    %c0_15 = arith.constant 0 : index
    %c0_16 = arith.constant 0 : index
    %c0_17 = arith.constant 0 : index
    %c0_18 = arith.constant 0 : index
    %12 = vector.load %arg2[%c0_15, %c0_16, %c0_17, %c0_18] : memref<1x8x8x16xf32, #tpu.memory_space<vmem>>, vector<1x8x8x16xf32>
    %13 = vector.shape_cast %12 : vector<1x8x8x16xf32> to vector<8x8x16xf32>
    %c0_19 = arith.constant 0 : index
    %c0_20 = arith.constant 0 : index
    %c0_21 = arith.constant 0 : index
    %14 = vector.load %arg8[%c0_19, %c0_20, %c0_21] : memref<2x8x16xf32, #tpu.memory_space<vmem>>, vector<1x8x16xf32>
    %c1_22 = arith.constant 1 : index
    %c0_23 = arith.constant 0 : index
    %c0_24 = arith.constant 0 : index
    %15 = vector.load %arg8[%c1_22, %c0_23, %c0_24] : memref<2x8x16xf32, #tpu.memory_space<vmem>>, vector<1x8x16xf32>
    %16 = vector.extract_strided_slice %13 {offsets = [0, 0, 0], sizes = [7, 8, 16], strides = [1, 1, 1]} : vector<8x8x16xf32> to vector<7x8x16xf32>
    %17 = tpu.concatenate %14, %16 in 0 : vector<1x8x16xf32>, vector<7x8x16xf32> -> vector<8x8x16xf32>
    %18 = vector.extract_strided_slice %13 {offsets = [1, 0, 0], sizes = [7, 8, 16], strides = [1, 1, 1]} : vector<8x8x16xf32> to vector<7x8x16xf32>
    %19 = tpu.concatenate %18, %15 in 0 : vector<7x8x16xf32>, vector<1x8x16xf32> -> vector<8x8x16xf32>
    %cst = arith.constant 0.000000e+00 : f32
    %20 = vector.broadcast %cst : f32 to vector<8x1x16xf32>
    %c0_25 = arith.constant 0 : index
    %c0_26 = arith.constant 0 : index
    %c0_27 = arith.constant 0 : index
    %21 = vector.load %arg6[%c0_25, %c0_26, %c0_27] : memref<1x1x8xf32, #tpu.memory_space<vmem>>, vector<1x1x8xf32>
    %22 = vector.extract_strided_slice %17 {offsets = [0, 0, 0], sizes = [8, 7, 16], strides = [1, 1, 1]} : vector<8x8x16xf32> to vector<8x7x16xf32>
    %23 = tpu.concatenate %20, %22 in 1 : vector<8x1x16xf32>, vector<8x7x16xf32> -> vector<8x8x16xf32>
    %24 = vector.extract_strided_slice %17 {offsets = [0, 1, 0], sizes = [8, 7, 16], strides = [1, 1, 1]} : vector<8x8x16xf32> to vector<8x7x16xf32>
    %25 = tpu.concatenate %24, %20 in 1 : vector<8x7x16xf32>, vector<8x1x16xf32> -> vector<8x8x16xf32>
    %c0_28 = arith.constant 0 : index
    %c0_29 = arith.constant 0 : index
    %c0_30 = arith.constant 0 : index
    %26 = vector.load %arg5[%c0_28, %c0_29, %c0_30] : memref<9x16x8xf32, #tpu.memory_space<vmem>>, vector<1x16x8xf32>
    %27 = vector.shape_cast %26 : vector<1x16x8xf32> to vector<16x8xf32>
    %cst_31 = arith.constant dense<0.000000e+00> : vector<8x8x8xf32>
    %28 = tpu.matmul %23, %27, %cst_31 {dimension_numbers = #tpu.dot_dimension_numbers<[2], [0], [0, 1], [1], [0, 0, 0, 1, 1, 1], [], []>} : vector<8x8x16xf32>, vector<16x8xf32>, vector<8x8x8xf32> -> vector<8x8x8xf32>
    %29 = vector.broadcast %21 : vector<1x1x8xf32> to vector<8x8x8xf32>
    %30 = arith.addf %29, %28 : vector<8x8x8xf32>
    %c1_32 = arith.constant 1 : index
    %c0_33 = arith.constant 0 : index
    %c0_34 = arith.constant 0 : index
    %31 = vector.load %arg5[%c1_32, %c0_33, %c0_34] : memref<9x16x8xf32, #tpu.memory_space<vmem>>, vector<1x16x8xf32>
    %32 = vector.shape_cast %31 : vector<1x16x8xf32> to vector<16x8xf32>
    %cst_35 = arith.constant dense<0.000000e+00> : vector<8x8x8xf32>
    %33 = tpu.matmul %17, %32, %cst_35 {dimension_numbers = #tpu.dot_dimension_numbers<[2], [0], [0, 1], [1], [0, 0, 0, 1, 1, 1], [], []>} : vector<8x8x16xf32>, vector<16x8xf32>, vector<8x8x8xf32> -> vector<8x8x8xf32>
    %34 = arith.addf %30, %33 : vector<8x8x8xf32>
    %c2 = arith.constant 2 : index
    %c0_36 = arith.constant 0 : index
    %c0_37 = arith.constant 0 : index
    %35 = vector.load %arg5[%c2, %c0_36, %c0_37] : memref<9x16x8xf32, #tpu.memory_space<vmem>>, vector<1x16x8xf32>
    %36 = vector.shape_cast %35 : vector<1x16x8xf32> to vector<16x8xf32>
    %cst_38 = arith.constant dense<0.000000e+00> : vector<8x8x8xf32>
    %37 = tpu.matmul %25, %36, %cst_38 {dimension_numbers = #tpu.dot_dimension_numbers<[2], [0], [0, 1], [1], [0, 0, 0, 1, 1, 1], [], []>} : vector<8x8x16xf32>, vector<16x8xf32>, vector<8x8x8xf32> -> vector<8x8x8xf32>
    %38 = arith.addf %34, %37 : vector<8x8x8xf32>
    %39 = vector.extract_strided_slice %13 {offsets = [0, 0, 0], sizes = [8, 7, 16], strides = [1, 1, 1]} : vector<8x8x16xf32> to vector<8x7x16xf32>
    %40 = tpu.concatenate %20, %39 in 1 : vector<8x1x16xf32>, vector<8x7x16xf32> -> vector<8x8x16xf32>
    %41 = vector.extract_strided_slice %13 {offsets = [0, 1, 0], sizes = [8, 7, 16], strides = [1, 1, 1]} : vector<8x8x16xf32> to vector<8x7x16xf32>
    %42 = tpu.concatenate %41, %20 in 1 : vector<8x7x16xf32>, vector<8x1x16xf32> -> vector<8x8x16xf32>
    %c3 = arith.constant 3 : index
    %c0_39 = arith.constant 0 : index
    %c0_40 = arith.constant 0 : index
    %43 = vector.load %arg5[%c3, %c0_39, %c0_40] : memref<9x16x8xf32, #tpu.memory_space<vmem>>, vector<1x16x8xf32>
    %44 = vector.shape_cast %43 : vector<1x16x8xf32> to vector<16x8xf32>
    %cst_41 = arith.constant dense<0.000000e+00> : vector<8x8x8xf32>
    %45 = tpu.matmul %40, %44, %cst_41 {dimension_numbers = #tpu.dot_dimension_numbers<[2], [0], [0, 1], [1], [0, 0, 0, 1, 1, 1], [], []>} : vector<8x8x16xf32>, vector<16x8xf32>, vector<8x8x8xf32> -> vector<8x8x8xf32>
    %46 = arith.addf %38, %45 : vector<8x8x8xf32>
    %c4 = arith.constant 4 : index
    %c0_42 = arith.constant 0 : index
    %c0_43 = arith.constant 0 : index
    %47 = vector.load %arg5[%c4, %c0_42, %c0_43] : memref<9x16x8xf32, #tpu.memory_space<vmem>>, vector<1x16x8xf32>
    %48 = vector.shape_cast %47 : vector<1x16x8xf32> to vector<16x8xf32>
    %cst_44 = arith.constant dense<0.000000e+00> : vector<8x8x8xf32>
    %49 = tpu.matmul %13, %48, %cst_44 {dimension_numbers = #tpu.dot_dimension_numbers<[2], [0], [0, 1], [1], [0, 0, 0, 1, 1, 1], [], []>} : vector<8x8x16xf32>, vector<16x8xf32>, vector<8x8x8xf32> -> vector<8x8x8xf32>
    %50 = arith.addf %46, %49 : vector<8x8x8xf32>
    %c5 = arith.constant 5 : index
    %c0_45 = arith.constant 0 : index
    %c0_46 = arith.constant 0 : index
    %51 = vector.load %arg5[%c5, %c0_45, %c0_46] : memref<9x16x8xf32, #tpu.memory_space<vmem>>, vector<1x16x8xf32>
    %52 = vector.shape_cast %51 : vector<1x16x8xf32> to vector<16x8xf32>
    %cst_47 = arith.constant dense<0.000000e+00> : vector<8x8x8xf32>
    %53 = tpu.matmul %42, %52, %cst_47 {dimension_numbers = #tpu.dot_dimension_numbers<[2], [0], [0, 1], [1], [0, 0, 0, 1, 1, 1], [], []>} : vector<8x8x16xf32>, vector<16x8xf32>, vector<8x8x8xf32> -> vector<8x8x8xf32>
    %54 = arith.addf %50, %53 : vector<8x8x8xf32>
    %55 = vector.extract_strided_slice %19 {offsets = [0, 0, 0], sizes = [8, 7, 16], strides = [1, 1, 1]} : vector<8x8x16xf32> to vector<8x7x16xf32>
    %56 = tpu.concatenate %20, %55 in 1 : vector<8x1x16xf32>, vector<8x7x16xf32> -> vector<8x8x16xf32>
    %57 = vector.extract_strided_slice %19 {offsets = [0, 1, 0], sizes = [8, 7, 16], strides = [1, 1, 1]} : vector<8x8x16xf32> to vector<8x7x16xf32>
    %58 = tpu.concatenate %57, %20 in 1 : vector<8x7x16xf32>, vector<8x1x16xf32> -> vector<8x8x16xf32>
    %c6 = arith.constant 6 : index
    %c0_48 = arith.constant 0 : index
    %c0_49 = arith.constant 0 : index
    %59 = vector.load %arg5[%c6, %c0_48, %c0_49] : memref<9x16x8xf32, #tpu.memory_space<vmem>>, vector<1x16x8xf32>
    %60 = vector.shape_cast %59 : vector<1x16x8xf32> to vector<16x8xf32>
    %cst_50 = arith.constant dense<0.000000e+00> : vector<8x8x8xf32>
    %61 = tpu.matmul %56, %60, %cst_50 {dimension_numbers = #tpu.dot_dimension_numbers<[2], [0], [0, 1], [1], [0, 0, 0, 1, 1, 1], [], []>} : vector<8x8x16xf32>, vector<16x8xf32>, vector<8x8x8xf32> -> vector<8x8x8xf32>
    %62 = arith.addf %54, %61 : vector<8x8x8xf32>
    %c7 = arith.constant 7 : index
    %c0_51 = arith.constant 0 : index
    %c0_52 = arith.constant 0 : index
    %63 = vector.load %arg5[%c7, %c0_51, %c0_52] : memref<9x16x8xf32, #tpu.memory_space<vmem>>, vector<1x16x8xf32>
    %64 = vector.shape_cast %63 : vector<1x16x8xf32> to vector<16x8xf32>
    %cst_53 = arith.constant dense<0.000000e+00> : vector<8x8x8xf32>
    %65 = tpu.matmul %19, %64, %cst_53 {dimension_numbers = #tpu.dot_dimension_numbers<[2], [0], [0, 1], [1], [0, 0, 0, 1, 1, 1], [], []>} : vector<8x8x16xf32>, vector<16x8xf32>, vector<8x8x8xf32> -> vector<8x8x8xf32>
    %66 = arith.addf %62, %65 : vector<8x8x8xf32>
    %c8 = arith.constant 8 : index
    %c0_54 = arith.constant 0 : index
    %c0_55 = arith.constant 0 : index
    %67 = vector.load %arg5[%c8, %c0_54, %c0_55] : memref<9x16x8xf32, #tpu.memory_space<vmem>>, vector<1x16x8xf32>
    %68 = vector.shape_cast %67 : vector<1x16x8xf32> to vector<16x8xf32>
    %cst_56 = arith.constant dense<0.000000e+00> : vector<8x8x8xf32>
    %69 = tpu.matmul %58, %68, %cst_56 {dimension_numbers = #tpu.dot_dimension_numbers<[2], [0], [0, 1], [1], [0, 0, 0, 1, 1, 1], [], []>} : vector<8x8x16xf32>, vector<16x8xf32>, vector<8x8x8xf32> -> vector<8x8x8xf32>
    %70 = arith.addf %66, %69 : vector<8x8x8xf32>
    %71 = vector.shape_cast %70 : vector<8x8x8xf32> to vector<1x8x8x8xf32>
    %c0_57 = arith.constant 0 : index
    %c0_58 = arith.constant 0 : index
    %c0_59 = arith.constant 0 : index
    %c0_60 = arith.constant 0 : index
    %72 = vector.load %arg7[%c0_57, %c0_58, %c0_59, %c0_60] : memref<1x8x8x8xf32, #tpu.memory_space<vmem>>, vector<1x8x8x8xf32>
    tpu.vector_store %arg7[%c0_57, %c0_58, %c0_59, %c0_60], %71 {strides = array<i32>} : memref<1x8x8x8xf32, #tpu.memory_space<vmem>>, vector<1x8x8x8xf32>,
    return
  }
  func.func @transform_0(%arg0: i32, %arg1: i32) -> (i32, i32, i32, i32) {
    %c0_i32 = arith.constant 0 : i32
    %c0_i32_0 = arith.constant 0 : i32
    %c0_i32_1 = arith.constant 0 : i32
    return %arg0, %arg1, %c0_i32, %c0_i32_0 : i32, i32, i32, i32
  }
  func.func @transform_1(%arg0: i32, %arg1: i32) -> (i32, i32, i32, i32) {
    %c8_i32 = arith.constant 8 : i32
    %0 = arith.muli %arg1, %c8_i32 : i32
    %c1_i32 = arith.constant 1 : i32
    %1 = arith.subi %0, %c1_i32 : i32
    %c0_i32 = arith.constant 0 : i32
    %2 = arith.maxsi %1, %c0_i32 : i32
    %c0_i32_0 = arith.constant 0 : i32
    %c0_i32_1 = arith.constant 0 : i32
    %c0_i32_2 = arith.constant 0 : i32
    return %arg0, %2, %c0_i32_0, %c0_i32_1 : i32, i32, i32, i32
  }
  func.func @transform_2(%arg0: i32, %arg1: i32) -> (i32, i32, i32, i32) {
    %c1_i32 = arith.constant 1 : i32
    %0 = arith.addi %arg1, %c1_i32 : i32
    %c8_i32 = arith.constant 8 : i32
    %1 = arith.muli %0, %c8_i32 : i32
    %c7_i32 = arith.constant 7 : i32
    %2 = arith.minsi %1, %c7_i32 : i32
    %c0_i32 = arith.constant 0 : i32
    %c0_i32_0 = arith.constant 0 : i32
    %c0_i32_1 = arith.constant 0 : i32
    return %arg0, %2, %c0_i32, %c0_i32_0 : i32, i32, i32, i32
  }
  func.func @transform_3(%arg0: i32, %arg1: i32) -> (i32, i32, i32) {
    %c0_i32 = arith.constant 0 : i32
    %c0_i32_0 = arith.constant 0 : i32
    %c0_i32_1 = arith.constant 0 : i32
    %c0_i32_2 = arith.constant 0 : i32
    return %c0_i32, %c0_i32_0, %c0_i32_1 : i32, i32, i32
  }
  func.func @transform_4(%arg0: i32, %arg1: i32) -> (i32, i32, i32) {
    %c0_i32 = arith.constant 0 : i32
    %c0_i32_0 = arith.constant 0 : i32
    %c0_i32_1 = arith.constant 0 : i32
    %c0_i32_2 = arith.constant 0 : i32
    return %c0_i32, %c0_i32_0, %c0_i32_1 : i32, i32, i32
  }
  func.func @transform_5(%arg0: i32, %arg1: i32) -> (i32, i32, i32, i32) {
    %c0_i32 = arith.constant 0 : i32
    %c0_i32_0 = arith.constant 0 : i32
    %c0_i32_1 = arith.constant 0 : i32
    return %arg0, %arg1, %c0_i32, %c0_i32_0 : i32, i32, i32, i32
  }
}

</mosaic_0001>

<llo_original>
// kernel: tpu_custom_call.1
$region0: #{tpu_custom_call.1}
  #allocation0 [shape = 'u32[]', space=smem, size = 0x4, offset = 0x4, fixed_abs, tag = 'smem constant byte address 0x4 - core index']
  #allocation1 [shape = 'u32[72,128]{1,0:T(1,128)}', space=vmem, size = 0x9000, scoped, tag = 'internal scratch']
  #allocation2 [shape = 'f32[2,8,16]{2,1,0:T(8,128)}', space=vmem, size = 0x2000, scoped, tag = 'scratch operand']
  %s0 = inlined_call_operand.vmem [shape: f32[2,8,8,16], index: 0, kind: input, shape index: {}]
  %s1 = inlined_call_operand.hbm [shape: f32[2,8,8,16], index: 1, kind: input, shape index: {}]
  %s2 = inlined_call_operand.hbm [shape: f32[2,8,8,16], index: 2, kind: input, shape index: {}]
  %s3 = inlined_call_operand.vmem [shape: f32[9,16,8], index: 3, kind: input, shape index: {}]
  %s4 = inlined_call_operand.vmem [shape: f32[1,1,8], index: 4, kind: input, shape index: {}]
  %s5 = inlined_call_operand.hbm [shape: f32[2,8,8,8], index: 5, kind: output, shape index: {}]
  %s6 = sld [smem:[#allocation0]]
  $region65: #{tpu_custom_call.1} parent=0
    _
  %s8 = ssub.s32 1, %s6
  %s9 = scalar_select 0, %s8, %s6
  $region1: #{tpu_custom_call.1} parent=0
    #allocation3 [shape = 'u8[8192]{0}', space=vmem, size = 0x2000, scoped, tag = 'input window, operand 1']
    #allocation4 [shape = 's32[2]{0}', space=sflag, size = 0x8, scoped, tag = 'scoped memory for tpu_custom_call.1']
    #allocation5 [shape = 's32[2]{0}', space=sflag, size = 0x8, scoped, tag = 'scoped memory for tpu_custom_call.1']
    #allocation6 [shape = 'u8[8192]{0}', space=vmem, size = 0x2000, scoped, tag = 'input window, operand 2']
    #allocation7 [shape = 's32[2]{0}', space=sflag, size = 0x8, scoped, tag = 'scoped memory for tpu_custom_call.1']
    #allocation8 [shape = 'u8[65536]{0}', space=vmem, size = 0x10000, scoped, tag = 'output window, operand 0']
    %10 = vsyncpa [#allocation4], 0
    %s11 = scalar_lea.sflag [#allocation4], 1
    %12 = vsyncpa %s11, 0
    %13 = vsyncpa [#allocation7], 0
    %s14 = scalar_lea.sflag [#allocation7], 1
    %15 = vsyncpa %s14, 0
    %16 = vsyncpa [#allocation5], 0
    %s17 = scalar_lea.sflag [#allocation5], 1
    %18 = vsyncpa %s17, 0
    loop: start=0, step=1, limit=4
    $region2: #{tpu_custom_call.1} parent=1 // loop_pre_header
      _
    $region3: #{tpu_custom_call.1} parent=1 // loop_header
      %s20 = sphi 0, %s24
      %p21 = scmp.ge.s32.totalorder %s20, 4
      %s27 = sphi 0, %s39
      %s28 = sphi 0, %s35
      %s29 = sphi 0, %s27
      %s30 = sphi 0, %s28
      %s31 = sphi 0, %s29
      %s32 = sphi 0, %s30
      %s44 = sphi 0, %s46
      %s47 = sphi 0, %s44
      %s48 = sphi 0, %s47
      %s64 = sphi 0, %s48
      %s80 = sphi 0, %s82
      %s83 = sphi 0, %s80
      %s84 = sphi 0, %s83
      %s100 = sphi 0, %s84
      %s116 = sphi 0, %s118
      %s119 = sphi 0, %s116
      %s120 = sphi 0, %s119
      %s136 = sphi 0, %s120
      %s140 = sphi 0, %s140
      %s142 = sphi 0, %s140
      %s143 = sphi 0, %s142
      %s157 = sphi 0, %s143
      %s161 = sphi 0, %s161
      %s163 = sphi 0, %s161
      %s164 = sphi 0, %s163
      %s178 = sphi 0, %s164
      %s186 = sphi 0, %s188
      %s189 = sphi 0, %s186
      %s190 = sphi 0, %s189
      %s206 = sphi 0, %s190
    $region4: #{tpu_custom_call.1} parent=1 // loop_header_branch
      %23 = sbr.rel (%p21) target = $region8
    $region5: #{tpu_custom_call.1} parent=1 // loop_body
      %s25 = ssub.s32 %s20, 1
      %s26 = ssub.s32 %s20, 2
      %s33 = sadd.s32 1, %s28
      %p34 = scmp.ge.s32.totalorder %s33, 1
      %s35 = scalar_select %p34, 0, %s33
      %s36 = sadd.s32 1, %s27
      %s37 = scalar_select %p34, %s36, %s27
      %p38 = scmp.ge.s32.totalorder %s37, 2
      %s39 = scalar_select %p38, 0, %s37
      %s40 = ssub.s32 %s27, %s39
      %s41 = ssub.s32 %s28, %s35
      %s42 = sor.u32 %s40, %s41
      %p43 = scmp.eq.s32.totalorder %s42, 0
      %s45 = sadd.s32 %s44, 1
      %s46 = scalar_select %p43, %s44, %s45
      %p49 = pneg %p43
      %p50 = scmp.eq.s32.totalorder %s20, 1
      %p51 = por %p49, %p50
      %p52 = scmp.ne.s32.totalorder %s44, %s47
      %p53 = scmp.eq.s32.totalorder %s20, 0
      %p54 = por %p52, %p53
      %p55 = scmp.ne.s32.totalorder %s44, %s47
      %p56 = scmp.eq.s32.totalorder %s25, 1
      %p57 = por %p55, %p56
      %p58 = scmp.ne.s32.totalorder %s47, %s48
      %p59 = scmp.eq.s32.totalorder %s25, 0
      %p60 = por %p58, %p59
      %p61 = scmp.ne.s32.totalorder %s47, %s48
      %p62 = scmp.eq.s32.totalorder %s26, 1
      %p63 = por %p61, %p62
      %p65 = scmp.ne.s32.totalorder %s48, %s64
      %p66 = scmp.eq.s32.totalorder %s26, 0
      %p67 = por %p65, %p66
      %s68 = smul.u32 %s28, 8
      %s69 = ssub.s32 %s68, 1
      %p70 = scmp.gt.s32.totalorder %s69, 0
      %s71 = scalar_select %p70, %s69, 0
      %s72 = smul.u32 %s35, 8
      %s73 = ssub.s32 %s72, 1
      %p74 = scmp.gt.s32.totalorder %s73, 0
      %s75 = scalar_select %p74, %s73, 0
      %s76 = ssub.s32 %s27, %s39
      %s77 = ssub.s32 %s71, %s75
      %s78 = sor.u32 %s76, %s77
      %p79 = scmp.eq.s32.totalorder %s78, 0
      %s81 = sadd.s32 %s80, 1
      %s82 = scalar_select %p79, %s80, %s81
      %p85 = pneg %p79
      %p86 = scmp.eq.s32.totalorder %s20, 1
      %p87 = por %p85, %p86
      %p88 = scmp.ne.s32.totalorder %s80, %s83
      %p89 = scmp.eq.s32.totalorder %s20, 0
      %p90 = por %p88, %p89
      %p91 = scmp.ne.s32.totalorder %s80, %s83
      %p92 = scmp.eq.s32.totalorder %s25, 1
      %p93 = por %p91, %p92
      %p94 = scmp.ne.s32.totalorder %s83, %s84
      %p95 = scmp.eq.s32.totalorder %s25, 0
      %p96 = por %p94, %p95
      %p97 = scmp.ne.s32.totalorder %s83, %s84
      %p98 = scmp.eq.s32.totalorder %s26, 1
      %p99 = por %p97, %p98
      %p101 = scmp.ne.s32.totalorder %s84, %s100
      %p102 = scmp.eq.s32.totalorder %s26, 0
      %p103 = por %p101, %p102
      %s104 = sadd.s32 %s28, 1
      %s105 = smul.u32 %s104, 8
      %p106 = scmp.lt.s32.totalorder %s105, 7
      %s107 = scalar_select %p106, %s105, 7
      %s108 = sadd.s32 %s35, 1
      %s109 = smul.u32 %s108, 8
      %p110 = scmp.lt.s32.totalorder %s109, 7
      %s111 = scalar_select %p110, %s109, 7
      %s112 = ssub.s32 %s27, %s39
      %s113 = ssub.s32 %s107, %s111
      %s114 = sor.u32 %s112, %s113
      %p115 = scmp.eq.s32.totalorder %s114, 0
      %s117 = sadd.s32 %s116, 1
      %s118 = scalar_select %p115, %s116, %s117
      %p121 = pneg %p115
      %p122 = scmp.eq.s32.totalorder %s20, 1
      %p123 = por %p121, %p122
      %p124 = scmp.ne.s32.totalorder %s116, %s119
      %p125 = scmp.eq.s32.totalorder %s20, 0
      %p126 = por %p124, %p125
      %p127 = scmp.ne.s32.totalorder %s116, %s119
      %p128 = scmp.eq.s32.totalorder %s25, 1
      %p129 = por %p127, %p128
      %p130 = scmp.ne.s32.totalorder %s119, %s120
      %p131 = scmp.eq.s32.totalorder %s25, 0
      %p132 = por %p130, %p131
      %p133 = scmp.ne.s32.totalorder %s119, %s120
      %p134 = scmp.eq.s32.totalorder %s26, 1
      %p135 = por %p133, %p134
      %p137 = scmp.ne.s32.totalorder %s120, %s136
      %p138 = scmp.eq.s32.totalorder %s26, 0
      %p139 = por %p137, %p138
      %s141 = sadd.s32 %s140, 1
      %p144 = scmp.eq.s32.totalorder %s20, 1
      %p145 = scmp.ne.s32.totalorder %s140, %s142
      %p146 = scmp.eq.s32.totalorder %s20, 0
      %p147 = por %p145, %p146
      %p148 = scmp.ne.s32.totalorder %s140, %s142
      %p149 = scmp.eq.s32.totalorder %s25, 1
      %p150 = por %p148, %p149
      %p151 = scmp.ne.s32.totalorder %s142, %s143
      %p152 = scmp.eq.s32.totalorder %s25, 0
      %p153 = por %p151, %p152
      %p154 = scmp.ne.s32.totalorder %s142, %s143
      %p155 = scmp.eq.s32.totalorder %s26, 1
      %p156 = por %p154, %p155
      %p158 = scmp.ne.s32.totalorder %s143, %s157
      %p159 = scmp.eq.s32.totalorder %s26, 0
      %p160 = por %p158, %p159
      %s162 = sadd.s32 %s161, 1
      %p165 = scmp.eq.s32.totalorder %s20, 1
      %p166 = scmp.ne.s32.totalorder %s161, %s163
      %p167 = scmp.eq.s32.totalorder %s20, 0
      %p168 = por %p166, %p167
      %p169 = scmp.ne.s32.totalorder %s161, %s163
      %p170 = scmp.eq.s32.totalorder %s25, 1
      %p171 = por %p169, %p170
      %p172 = scmp.ne.s32.totalorder %s163, %s164
      %p173 = scmp.eq.s32.totalorder %s25, 0
      %p174 = por %p172, %p173
      %p175 = scmp.ne.s32.totalorder %s163, %s164
      %p176 = scmp.eq.s32.totalorder %s26, 1
      %p177 = por %p175, %p176
      %p179 = scmp.ne.s32.totalorder %s164, %s178
      %p180 = scmp.eq.s32.totalorder %s26, 0
      %p181 = por %p179, %p180
      %s182 = ssub.s32 %s27, %s39
      %s183 = ssub.s32 %s28, %s35
      %s184 = sor.u32 %s182, %s183
      %p185 = scmp.eq.s32.totalorder %s184, 0
      %s187 = sadd.s32 %s186, 1
      %s188 = scalar_select %p185, %s186, %s187
      %p191 = pneg %p185
      %p192 = scmp.eq.s32.totalorder %s20, 1
      %p193 = por %p191, %p192
      %p194 = scmp.ne.s32.totalorder %s186, %s189
      %p195 = scmp.eq.s32.totalorder %s20, 0
      %p196 = por %p194, %p195
      %p197 = scmp.ne.s32.totalorder %s186, %s189
      %p198 = scmp.eq.s32.totalorder %s25, 1
      %p199 = por %p197, %p198
      %p200 = scmp.ne.s32.totalorder %s189, %s190
      %p201 = scmp.eq.s32.totalorder %s25, 0
      %p202 = por %p200, %p201
      %p203 = scmp.ne.s32.totalorder %s189, %s190
      %p204 = scmp.eq.s32.totalorder %s26, 1
      %p205 = por %p203, %p204
      %p207 = scmp.ne.s32.totalorder %s190, %s206
      %p208 = scmp.eq.s32.totalorder %s26, 0
      %p209 = por %p207, %p208
      %p210 = scmp.le.s32.totalorder 1, %s20
      %p211 = scmp.lt.s32.totalorder %s20, 3
      %p212 = pnand %p210, %p211
      %p213 = pneg %p212
      // Predicated region
      $region9: #{tpu_custom_call.1} parent=5 // pred_check
        _
      $region10: #{tpu_custom_call.1} parent=5 // pred_check_branch
        %215 = sbr.rel (%p212) target = $region12
      $region11: #{tpu_custom_call.1} parent=5 // pred_region
        %s216 = ssub.s32 %s20, 1
        // Predicated region
        $region13: #{tpu_custom_call.1} parent=11 // pred_check
          %p217 = pneg %p153
        $region14: #{tpu_custom_call.1} parent=11 // pred_check_branch
          %219 = sbr.rel (%p217) target = $region16
        $region15: #{tpu_custom_call.1} parent=11 // pred_region
          _
        $region16: #{tpu_custom_call.1} parent=11 // pred_fallthru
          _
        // Predicated region
        $region17: #{tpu_custom_call.1} parent=11 // pred_check
          %p220 = pneg %p174
        $region18: #{tpu_custom_call.1} parent=11 // pred_check_branch
          %222 = sbr.rel (%p220) target = $region20
        $region19: #{tpu_custom_call.1} parent=11 // pred_region
          _
        $region20: #{tpu_custom_call.1} parent=11 // pred_fallthru
          _
      $region12: #{tpu_custom_call.1} parent=5 // pred_fallthru
        _
      %p223 = scmp.lt.s32.totalorder %s20, 2
      // Predicated region
      $region21: #{tpu_custom_call.1} parent=5 // pred_check
        %p224 = pneg %p223
      $region22: #{tpu_custom_call.1} parent=5 // pred_check_branch
        %226 = sbr.rel (%p224) target = $region24
      $region23: #{tpu_custom_call.1} parent=5 // pred_region
        // Predicated region
        $region25: #{tpu_custom_call.1} parent=23 // pred_check
          %p227 = pneg %p54
        $region26: #{tpu_custom_call.1} parent=23 // pred_check_branch
          %229 = sbr.rel (%p227) target = $region28
        $region27: #{tpu_custom_call.1} parent=23 // pred_region
          %s230 = smul.u32 8, %s28
          %p231 = scmp.lt.s32.totalorder %s27, 1
          %s232 = scalar_select %p231, %s27, 1
          %p233 = scmp.lt.s32.totalorder %s230, 7
          %s234 = scalar_select %p233, %s230, 7
          %s235 = smul.addr %s232, 8
          %s236 = sadd.s32 %s234, %s235
          %s237 = smul.addr %s236, 8
          %s238 = scalar_lea.vmem %s0, %s237
          %s239 = smul.u32 8, %s28
        $region28: #{tpu_custom_call.1} parent=23 // pred_fallthru
          _
        // Predicated region
        $region29: #{tpu_custom_call.1} parent=23 // pred_check
          %p240 = pneg %p90
        $region30: #{tpu_custom_call.1} parent=23 // pred_check_branch
          %242 = sbr.rel (%p240) target = $region32
        $region31: #{tpu_custom_call.1} parent=23 // pred_region
          %s243 = sand.u32 %s80, 1
          %s244 = scalar_lea.sflag [#allocation4], %s243
          %s245 = sand.u32 %s80, 1
          %s246 = smul.addr %s245, 8
          %s247 = scalar_lea.vmem [#allocation3], %s246
          %s248 = smul.u32 %s28, 8
          %s249 = ssub.s32 %s248, 1
          %p250 = scmp.gt.s32.totalorder %s249, 0
          %s251 = scalar_select %p250, %s249, 0
          %253 = vsyncadd %s244, 0
          %s254 = smul.addr %s27, 8
          %s255 = sadd.s32 %s251, %s254
          %s256 = smul.addr %s255, 8
          %s257 = scalar_lea.hbm %s1, %s256
          %s259 = sshll.u32 %s257, 4
          %s260 = int_to_ptr.hbm [resolvable:$true] %s259
          %s261 = sshll.u32 %s247, 4
          %s262 = int_to_ptr.vmem [resolvable:$true] %s261
          %264 = dma.hbm_to_vmem [thread:$0]  %s260, 128, %s262, %s244
        $region32: #{tpu_custom_call.1} parent=23 // pred_fallthru
          _
        // Predicated region
        $region33: #{tpu_custom_call.1} parent=23 // pred_check
          %p265 = pneg %p126
        $region34: #{tpu_custom_call.1} parent=23 // pred_check_branch
          %267 = sbr.rel (%p265) target = $region36
        $region35: #{tpu_custom_call.1} parent=23 // pred_region
          %s268 = sand.u32 %s116, 1
          %s269 = scalar_lea.sflag [#allocation7], %s268
          %s270 = sand.u32 %s116, 1
          %s271 = smul.addr %s270, 8
          %s272 = scalar_lea.vmem [#allocation6], %s271
          %s273 = sadd.s32 %s28, 1
          %s274 = smul.u32 %s273, 8
          %p275 = scmp.lt.s32.totalorder %s274, 7
          %s276 = scalar_select %p275, %s274, 7
          %278 = vsyncadd %s269, 0
          %s279 = smul.addr %s27, 8
          %s280 = sadd.s32 %s276, %s279
          %s281 = smul.addr %s280, 8
          %s282 = scalar_lea.hbm %s2, %s281
          %s284 = sshll.u32 %s282, 4
          %s285 = int_to_ptr.hbm [resolvable:$true] %s284
          %s286 = sshll.u32 %s272, 4
          %s287 = int_to_ptr.vmem [resolvable:$true] %s286
          %289 = dma.hbm_to_vmem [thread:$0]  %s285, 128, %s287, %s269
        $region36: #{tpu_custom_call.1} parent=23 // pred_fallthru
          _
      $region24: #{tpu_custom_call.1} parent=5 // pred_fallthru
        _
      %p290 = scmp.le.s32.totalorder 1, %s20
      %p291 = scmp.lt.s32.totalorder %s20, 3
      %p292 = pnand %p290, %p291
      %p293 = pneg %p292
      // Predicated region
      $region37: #{tpu_custom_call.1} parent=5 // pred_check
        _
      $region38: #{tpu_custom_call.1} parent=5 // pred_check_branch
        %295 = sbr.rel (%p292) target = $region40
      $region39: #{tpu_custom_call.1} parent=5 // pred_region
        %s296 = ssub.s32 %s20, 1
        %s297 = sand.u32 %s83, 1
        %s298 = scalar_lea.sflag [#allocation4], %s297
        %s299 = sand.u32 %s83, 1
        %s300 = smul.addr %s299, 8
        %s301 = scalar_lea.vmem [#allocation3], %s300
        // Predicated region
        $region41: #{tpu_custom_call.1} parent=39 // pred_check
          %p302 = pneg %p96
        $region42: #{tpu_custom_call.1} parent=39 // pred_check_branch
          %304 = sbr.rel (%p302) target = $region44
        $region43: #{tpu_custom_call.1} parent=39 // pred_region
          %306 = dma.done %s298, 128
        $region44: #{tpu_custom_call.1} parent=39 // pred_fallthru
          _
        %s307 = sand.u32 %s119, 1
        %s308 = scalar_lea.sflag [#allocation7], %s307
        %s309 = sand.u32 %s119, 1
        %s310 = smul.addr %s309, 8
        %s311 = scalar_lea.vmem [#allocation6], %s310
        // Predicated region
        $region45: #{tpu_custom_call.1} parent=39 // pred_check
          %p312 = pneg %p132
        $region46: #{tpu_custom_call.1} parent=39 // pred_check_branch
          %314 = sbr.rel (%p312) target = $region48
        $region47: #{tpu_custom_call.1} parent=39 // pred_region
          %316 = dma.done %s308, 128
        $region48: #{tpu_custom_call.1} parent=39 // pred_fallthru
          _
        %s317 = smul.u32 8, %s30
        %p318 = scmp.lt.s32.totalorder %s29, 1
        %s319 = scalar_select %p318, %s29, 1
        %p320 = scmp.lt.s32.totalorder %s317, 7
        %s321 = scalar_select %p320, %s317, 7
        %s322 = smul.addr %s319, 8
        %s323 = sadd.s32 %s321, %s322
        %s324 = smul.addr %s323, 8
        %s325 = scalar_lea.vmem %s0, %s324
        %p326 = pneg %p60
        %p327 = pneg %p57
        %s328 = sand.u32 %s83, 1
        %s329 = scalar_lea.sflag [#allocation4], %s328
        %s330 = sand.u32 %s83, 1
        %s331 = smul.addr %s330, 8
        %s332 = scalar_lea.vmem [#allocation3], %s331
        %p333 = pneg %p96
        %p334 = pneg %p93
        %s335 = sand.u32 %s119, 1
        %s336 = scalar_lea.sflag [#allocation7], %s335
        %s337 = sand.u32 %s119, 1
        %s338 = smul.addr %s337, 8
        %s339 = scalar_lea.vmem [#allocation6], %s338
        %p340 = pneg %p132
        %p341 = pneg %p129
        %p342 = pneg %p153
        %p343 = pneg %p150
        %p344 = pneg %p174
        %p345 = pneg %p171
        %p346 = pneg %p202
        %p347 = pneg %p199
        %s348 = sand.u32 %s189, 1
        %s349 = scalar_lea.sflag [#allocation5], %s348
        %s350 = sand.u32 %s189, 1
        %s351 = smul.addr %s350, 64
        %s352 = scalar_lea.vmem [#allocation8], %s351
        %s353 = smul.u32 8, %s30
        %p354 = scmp.lt.s32.totalorder %s29, 1
        %s355 = scalar_select %p354, %s29, 1
        %p356 = scmp.lt.s32.totalorder %s353, 7
        %s357 = scalar_select %p356, %s353, 7
        %s358 = smul.addr %s355, 8
        %s359 = sadd.s32 %s357, %s358
        %s360 = smul.addr %s359, 8
        %s361 = scalar_lea.vmem %s0, %s360
        %s362 = smul.u32 8, %s30
        %s363 = smul.u32 %s30, 8
        %s364 = ssub.s32 %s363, 1
        %p365 = scmp.gt.s32.totalorder %s364, 0
        %s366 = scalar_select %p365, %s364, 0
        %s367 = sadd.s32 %s30, 1
        %s368 = smul.u32 %s367, 8
        %p369 = scmp.lt.s32.totalorder %s368, 7
        %s370 = scalar_select %p369, %s368, 7
        %s371 = smul.u32 8, %s30
        %v372 = vld [vmem:[%s301] sm:$0xff]
        %vm373 = vcmask 130048
        %374 = vst.msk [vmem:[#allocation2] sm:$0xff] %vm373, %v372
        %v375 = vld [vmem:[%s311] sm:$0xff]
        %s376 = scalar_lea.vmem [#allocation2], 8
        %377 = vst.msk [vmem:[%s376] sm:$0xff] %vm373, %v375
        %p378 = scmp.eq.s32.totalorder %s30, 0
        // Predicated region
        $region49: #{tpu_custom_call.1} parent=39 // pred_check
          %p379 = pneg %p378
        $region50: #{tpu_custom_call.1} parent=39 // pred_check_branch
          %381 = sbr.rel (%p379) target = $region52
        $region51: #{tpu_custom_call.1} parent=39 // pred_region
          %382 = vst.msk [vmem:[#allocation2] sm:$0xff] %vm373, 0.0
          %383 = vst.msk [vmem:[%s376] sm:$0xff] %vm373, 0.0
        $region52: #{tpu_custom_call.1} parent=39 // pred_fallthru
          _
        %v384 = vld [vmem:[%s361] sm:$0xff]
        %v385 = vld [vmem:[%s361 + $0x8] sm:$0xff]
        %v386 = vld [vmem:[%s361 + $0x10] sm:$0xff]
        %v387 = vld [vmem:[%s361 + $0x18] sm:$0xff]
        %v388 = vld [vmem:[%s361 + $0x20] sm:$0xff]
        %v389 = vld [vmem:[%s361 + $0x28] sm:$0xff]
        %v390 = vld [vmem:[%s361 + $0x30] sm:$0xff]
        %v391 = vld [vmem:[%s361 + $0x38] sm:$0xff]
        %v392 = vld [vmem:[#allocation2] sm:$0xff]
        %v393 = vld [vmem:[%s376] sm:$0xff]
        %v394 = vld [vmem:[%s4] sm:$0x1]
        %v403 = vrot.slane %v392, 7
        %v404 = vrot.slane %v384, 7
        %v405 = vrot.slane %v385, 7
        %v406 = vrot.slane %v386, 7
        %v407 = vrot.slane %v387, 7
        %v408 = vrot.slane %v388, 7
        %v409 = vrot.slane %v389, 7
        %v410 = vrot.slane %v390, 7
        %vm419 = vcmask 1040384
        %v420 = vsel %vm419, 0.0, %v403
        %v421 = vsel %vm419, 0.0, %v404
        %v422 = vsel %vm419, 0.0, %v405
        %v423 = vsel %vm419, 0.0, %v406
        %v424 = vsel %vm419, 0.0, %v407
        %v425 = vsel %vm419, 0.0, %v408
        %v426 = vsel %vm419, 0.0, %v409
        %v427 = vsel %vm419, 0.0, %v410
        %v428 = vrot.slane %v392, 1
        %v429 = vrot.slane %v384, 1
        %v430 = vrot.slane %v385, 1
        %v431 = vrot.slane %v386, 1
        %v432 = vrot.slane %v387, 1
        %v433 = vrot.slane %v388, 1
        %v434 = vrot.slane %v389, 1
        %v435 = vrot.slane %v390, 1
        %vm444 = vcmask 1046528
        %v445 = vsel %vm444, %v428, 0.0
        %v446 = vsel %vm444, %v429, 0.0
        %v447 = vsel %vm444, %v430, 0.0
        %v448 = vsel %vm444, %v431, 0.0
        %v449 = vsel %vm444, %v432, 0.0
        %v450 = vsel %vm444, %v433, 0.0
        %v451 = vsel %vm444, %v434, 0.0
        %v452 = vsel %vm444, %v435, 0.0
        %v453 = vld [vmem:[%s3] sm:$0xff]
        %v454 = vld [vmem:[%s3 + $0x8] sm:$0xff]
        %v456 = vsel %vm373, %v420, 0
        %v459 = vsel %vm373, %v421, 0
        %v462 = vsel %vm373, %v422, 0
        %v465 = vsel %vm373, %v423, 0
        %v468 = vsel %vm373, %v424, 0
        %v471 = vsel %vm373, %v425, 0
        %v474 = vsel %vm373, %v426, 0
        %v477 = vsel %vm373, %v427, 0
        %479 = vmatpush.msra.mxu0 0.0
        %480 = vmatpush.msra.mxu0 0.0
        %481 = vmatpush.msra.mxu0 0.0
        %482 = vmatpush.msra.mxu0 0.0
        %483 = vmatpush.msra.mxu0 0.0
        %484 = vmatpush.msra.mxu0 0.0
        %485 = vmatpush.msra.mxu0 0.0
        %486 = vmatpush.msra.mxu0 0.0
        %487 = vmatpush.msra.mxu0 0.0
        %488 = vmatpush.msra.mxu0 0.0
        %489 = vmatpush.msra.mxu0 0.0
        %490 = vmatpush.msra.mxu0 0.0
        %491 = vmatpush.msra.mxu0 0.0
        %492 = vmatpush.msra.mxu0 0.0
        %493 = vmatpush.msra.mxu0 %v454
        %494 = vmatpush.msra.mxu0 %v453
        %495 = vmatmul.f32.gmra.mxu0 %v456
        %v496 = vpop.f32.mrf.mxu0
        %v497 = vadd.f32 0.0, %v496
        %498 = vmatmul.f32.gmra.mxu0 %v459
        %v499 = vpop.f32.mrf.mxu0
        %v500 = vadd.f32 0.0, %v499
        %501 = vmatmul.f32.gmra.mxu0 %v462
        %v502 = vpop.f32.mrf.mxu0
        %v503 = vadd.f32 0.0, %v502
        %504 = vmatmul.f32.gmra.mxu0 %v465
        %v505 = vpop.f32.mrf.mxu0
        %v506 = vadd.f32 0.0, %v505
        %507 = vmatmul.f32.gmra.mxu0 %v468
        %v508 = vpop.f32.mrf.mxu0
        %v509 = vadd.f32 0.0, %v508
        %510 = vmatmul.f32.gmra.mxu0 %v471
        %v511 = vpop.f32.mrf.mxu0
        %v512 = vadd.f32 0.0, %v511
        %513 = vmatmul.f32.gmra.mxu0 %v474
        %v514 = vpop.f32.mrf.mxu0
        %v515 = vadd.f32 0.0, %v514
        %516 = vmatmul.f32.gmra.mxu0 %v477
        %v517 = vpop.f32.mrf.mxu0
        %v518 = vadd.f32 0.0, %v517
        %519 = vdwg.mxu0
        %v521 = vperm.slane %v394, 0
        %v523 = vadd.f32 %v521, %v497
        %v524 = vadd.f32 %v521, %v500
        %v525 = vadd.f32 %v521, %v503
        %v526 = vadd.f32 %v521, %v506
        %v527 = vadd.f32 %v521, %v509
        %v528 = vadd.f32 %v521, %v512
        %v529 = vadd.f32 %v521, %v515
        %v530 = vadd.f32 %v521, %v518
        %s531 = scalar_lea.vmem %s3, 16
        %v532 = vld [vmem:[%s531] sm:$0xff]
        %v533 = vld [vmem:[%s531 + $0x8] sm:$0xff]
        %v534 = vsel %vm373, %v392, 0
        %v536 = vsel %vm373, %v384, 0
        %v538 = vsel %vm373, %v385, 0
        %v540 = vsel %vm373, %v386, 0
        %v542 = vsel %vm373, %v387, 0
        %v544 = vsel %vm373, %v388, 0
        %v546 = vsel %vm373, %v389, 0
        %v548 = vsel %vm373, %v390, 0
        %550 = vmatpush.msra.mxu0 0.0
        %551 = vmatpush.msra.mxu0 0.0
        %552 = vmatpush.msra.mxu0 0.0
        %553 = vmatpush.msra.mxu0 0.0
        %554 = vmatpush.msra.mxu0 0.0
        %555 = vmatpush.msra.mxu0 0.0
        %556 = vmatpush.msra.mxu0 0.0
        %557 = vmatpush.msra.mxu0 0.0
        %558 = vmatpush.msra.mxu0 0.0
        %559 = vmatpush.msra.mxu0 0.0
        %560 = vmatpush.msra.mxu0 0.0
        %561 = vmatpush.msra.mxu0 0.0
        %562 = vmatpush.msra.mxu0 0.0
        %563 = vmatpush.msra.mxu0 0.0
        %564 = vmatpush.msra.mxu0 %v533
        %565 = vmatpush.msra.mxu0 %v532
        %566 = vmatmul.f32.gmra.mxu0 %v534
        %v567 = vpop.f32.mrf.mxu0
        %v568 = vadd.f32 0.0, %v567
        %569 = vmatmul.f32.gmra.mxu0 %v536
        %v570 = vpop.f32.mrf.mxu0
        %v571 = vadd.f32 0.0, %v570
        %572 = vmatmul.f32.gmra.mxu0 %v538
        %v573 = vpop.f32.mrf.mxu0
        %v574 = vadd.f32 0.0, %v573
        %575 = vmatmul.f32.gmra.mxu0 %v540
        %v576 = vpop.f32.mrf.mxu0
        %v577 = vadd.f32 0.0, %v576
        %578 = vmatmul.f32.gmra.mxu0 %v542
        %v579 = vpop.f32.mrf.mxu0
        %v580 = vadd.f32 0.0, %v579
        %581 = vmatmul.f32.gmra.mxu0 %v544
        %v582 = vpop.f32.mrf.mxu0
        %v583 = vadd.f32 0.0, %v582
        %584 = vmatmul.f32.gmra.mxu0 %v546
        %v585 = vpop.f32.mrf.mxu0
        %v586 = vadd.f32 0.0, %v585
        %587 = vmatmul.f32.gmra.mxu0 %v548
        %v588 = vpop.f32.mrf.mxu0
        %v589 = vadd.f32 0.0, %v588
        %590 = vdwg.mxu0
        %v591 = vadd.f32 %v523, %v568
        %v592 = vadd.f32 %v524, %v571
        %v593 = vadd.f32 %v525, %v574
        %v594 = vadd.f32 %v526, %v577
        %v595 = vadd.f32 %v527, %v580
        %v596 = vadd.f32 %v528, %v583
        %v597 = vadd.f32 %v529, %v586
        %v598 = vadd.f32 %v530, %v589
        %s599 = scalar_lea.vmem %s3, 32
        %v600 = vld [vmem:[%s599] sm:$0xff]
        %v601 = vld [vmem:[%s599 + $0x8] sm:$0xff]
        %v603 = vsel %vm373, %v445, 0
        %v606 = vsel %vm373, %v446, 0
        %v609 = vsel %vm373, %v447, 0
        %v612 = vsel %vm373, %v448, 0
        %v615 = vsel %vm373, %v449, 0
        %v618 = vsel %vm373, %v450, 0
        %v621 = vsel %vm373, %v451, 0
        %v624 = vsel %vm373, %v452, 0
        %626 = vmatpush.msra.mxu0 0.0
        %627 = vmatpush.msra.mxu0 0.0
        %628 = vmatpush.msra.mxu0 0.0
        %629 = vmatpush.msra.mxu0 0.0
        %630 = vmatpush.msra.mxu0 0.0
        %631 = vmatpush.msra.mxu0 0.0
        %632 = vmatpush.msra.mxu0 0.0
        %633 = vmatpush.msra.mxu0 0.0
        %634 = vmatpush.msra.mxu0 0.0
        %635 = vmatpush.msra.mxu0 0.0
        %636 = vmatpush.msra.mxu0 0.0
        %637 = vmatpush.msra.mxu0 0.0
        %638 = vmatpush.msra.mxu0 0.0
        %639 = vmatpush.msra.mxu0 0.0
        %640 = vmatpush.msra.mxu0 %v601
        %641 = vmatpush.msra.mxu0 %v600
        %642 = vmatmul.f32.gmra.mxu0 %v603
        %v643 = vpop.f32.mrf.mxu0
        %v644 = vadd.f32 0.0, %v643
        %645 = vmatmul.f32.gmra.mxu0 %v606
        %v646 = vpop.f32.mrf.mxu0
        %v647 = vadd.f32 0.0, %v646
        %648 = vmatmul.f32.gmra.mxu0 %v609
        %v649 = vpop.f32.mrf.mxu0
        %v650 = vadd.f32 0.0, %v649
        %651 = vmatmul.f32.gmra.mxu0 %v612
        %v652 = vpop.f32.mrf.mxu0
        %v653 = vadd.f32 0.0, %v652
        %654 = vmatmul.f32.gmra.mxu0 %v615
        %v655 = vpop.f32.mrf.mxu0
        %v656 = vadd.f32 0.0, %v655
        %657 = vmatmul.f32.gmra.mxu0 %v618
        %v658 = vpop.f32.mrf.mxu0
        %v659 = vadd.f32 0.0, %v658
        %660 = vmatmul.f32.gmra.mxu0 %v621
        %v661 = vpop.f32.mrf.mxu0
        %v662 = vadd.f32 0.0, %v661
        %663 = vmatmul.f32.gmra.mxu0 %v624
        %v664 = vpop.f32.mrf.mxu0
        %v665 = vadd.f32 0.0, %v664
        %666 = vdwg.mxu0
        %v667 = vadd.f32 %v591, %v644
        %v668 = vadd.f32 %v592, %v647
        %v669 = vadd.f32 %v593, %v650
        %v670 = vadd.f32 %v594, %v653
        %v671 = vadd.f32 %v595, %v656
        %v672 = vadd.f32 %v596, %v659
        %v673 = vadd.f32 %v597, %v662
        %v674 = vadd.f32 %v598, %v665
        %v676 = vrot.slane %v391, 7
        %v678 = vsel %vm419, 0.0, %v676
        %v679 = vrot.slane %v391, 1
        %v681 = vsel %vm444, %v679, 0.0
        %s682 = scalar_lea.vmem %s3, 48
        %v683 = vld [vmem:[%s682] sm:$0xff]
        %v684 = vld [vmem:[%s682 + $0x8] sm:$0xff]
        %v686 = vsel %vm373, %v678, 0
        %688 = vmatpush.msra.mxu0 0.0
        %689 = vmatpush.msra.mxu0 0.0
        %690 = vmatpush.msra.mxu0 0.0
        %691 = vmatpush.msra.mxu0 0.0
        %692 = vmatpush.msra.mxu0 0.0
        %693 = vmatpush.msra.mxu0 0.0
        %694 = vmatpush.msra.mxu0 0.0
        %695 = vmatpush.msra.mxu0 0.0
        %696 = vmatpush.msra.mxu0 0.0
        %697 = vmatpush.msra.mxu0 0.0
        %698 = vmatpush.msra.mxu0 0.0
        %699 = vmatpush.msra.mxu0 0.0
        %700 = vmatpush.msra.mxu0 0.0
        %701 = vmatpush.msra.mxu0 0.0
        %702 = vmatpush.msra.mxu0 %v684
        %703 = vmatpush.msra.mxu0 %v683
        %704 = vmatmul.f32.gmra.mxu0 %v459
        %v705 = vpop.f32.mrf.mxu0
        %v706 = vadd.f32 0.0, %v705
        %707 = vmatmul.f32.gmra.mxu0 %v462
        %v708 = vpop.f32.mrf.mxu0
        %v709 = vadd.f32 0.0, %v708
        %710 = vmatmul.f32.gmra.mxu0 %v465
        %v711 = vpop.f32.mrf.mxu0
        %v712 = vadd.f32 0.0, %v711
        %713 = vmatmul.f32.gmra.mxu0 %v468
        %v714 = vpop.f32.mrf.mxu0
        %v715 = vadd.f32 0.0, %v714
        %716 = vmatmul.f32.gmra.mxu0 %v471
        %v717 = vpop.f32.mrf.mxu0
        %v718 = vadd.f32 0.0, %v717
        %719 = vmatmul.f32.gmra.mxu0 %v474
        %v720 = vpop.f32.mrf.mxu0
        %v721 = vadd.f32 0.0, %v720
        %722 = vmatmul.f32.gmra.mxu0 %v477
        %v723 = vpop.f32.mrf.mxu0
        %v724 = vadd.f32 0.0, %v723
        %725 = vmatmul.f32.gmra.mxu0 %v686
        %v726 = vpop.f32.mrf.mxu0
        %v727 = vadd.f32 0.0, %v726
        %728 = vdwg.mxu0
        %v729 = vadd.f32 %v667, %v706
        %v730 = vadd.f32 %v668, %v709
        %v731 = vadd.f32 %v669, %v712
        %v732 = vadd.f32 %v670, %v715
        %v733 = vadd.f32 %v671, %v718
        %v734 = vadd.f32 %v672, %v721
        %v735 = vadd.f32 %v673, %v724
        %v736 = vadd.f32 %v674, %v727
        %s737 = scalar_lea.vmem %s3, 64
        %v738 = vld [vmem:[%s737] sm:$0xff]
        %v739 = vld [vmem:[%s737 + $0x8] sm:$0xff]
        %v740 = vsel %vm373, %v391, 0
        %742 = vmatpush.msra.mxu0 0.0
        %743 = vmatpush.msra.mxu0 0.0
        %744 = vmatpush.msra.mxu0 0.0
        %745 = vmatpush.msra.mxu0 0.0
        %746 = vmatpush.msra.mxu0 0.0
        %747 = vmatpush.msra.mxu0 0.0
        %748 = vmatpush.msra.mxu0 0.0
        %749 = vmatpush.msra.mxu0 0.0
        %750 = vmatpush.msra.mxu0 0.0
        %751 = vmatpush.msra.mxu0 0.0
        %752 = vmatpush.msra.mxu0 0.0
        %753 = vmatpush.msra.mxu0 0.0
        %754 = vmatpush.msra.mxu0 0.0
        %755 = vmatpush.msra.mxu0 0.0
        %756 = vmatpush.msra.mxu0 %v739
        %757 = vmatpush.msra.mxu0 %v738
        %758 = vmatmul.f32.gmra.mxu0 %v536
        %v759 = vpop.f32.mrf.mxu0
        %v760 = vadd.f32 0.0, %v759
        %761 = vmatmul.f32.gmra.mxu0 %v538
        %v762 = vpop.f32.mrf.mxu0
        %v763 = vadd.f32 0.0, %v762
        %764 = vmatmul.f32.gmra.mxu0 %v540
        %v765 = vpop.f32.mrf.mxu0
        %v766 = vadd.f32 0.0, %v765
        %767 = vmatmul.f32.gmra.mxu0 %v542
        %v768 = vpop.f32.mrf.mxu0
        %v769 = vadd.f32 0.0, %v768
        %770 = vmatmul.f32.gmra.mxu0 %v544
        %v771 = vpop.f32.mrf.mxu0
        %v772 = vadd.f32 0.0, %v771
        %773 = vmatmul.f32.gmra.mxu0 %v546
        %v774 = vpop.f32.mrf.mxu0
        %v775 = vadd.f32 0.0, %v774
        %776 = vmatmul.f32.gmra.mxu0 %v548
        %v777 = vpop.f32.mrf.mxu0
        %v778 = vadd.f32 0.0, %v777
        %779 = vmatmul.f32.gmra.mxu0 %v740
        %v780 = vpop.f32.mrf.mxu0
        %v781 = vadd.f32 0.0, %v780
        %782 = vdwg.mxu0
        %v783 = vadd.f32 %v729, %v760
        %v784 = vadd.f32 %v730, %v763
        %v785 = vadd.f32 %v731, %v766
        %v786 = vadd.f32 %v732, %v769
        %v787 = vadd.f32 %v733, %v772
        %v788 = vadd.f32 %v734, %v775
        %v789 = vadd.f32 %v735, %v778
        %v790 = vadd.f32 %v736, %v781
        %s791 = scalar_lea.vmem %s3, 80
        %v792 = vld [vmem:[%s791] sm:$0xff]
        %v793 = vld [vmem:[%s791 + $0x8] sm:$0xff]
        %v795 = vsel %vm373, %v681, 0
        %797 = vmatpush.msra.mxu0 0.0
        %798 = vmatpush.msra.mxu0 0.0
        %799 = vmatpush.msra.mxu0 0.0
        %800 = vmatpush.msra.mxu0 0.0
        %801 = vmatpush.msra.mxu0 0.0
        %802 = vmatpush.msra.mxu0 0.0
        %803 = vmatpush.msra.mxu0 0.0
        %804 = vmatpush.msra.mxu0 0.0
        %805 = vmatpush.msra.mxu0 0.0
        %806 = vmatpush.msra.mxu0 0.0
        %807 = vmatpush.msra.mxu0 0.0
        %808 = vmatpush.msra.mxu0 0.0
        %809 = vmatpush.msra.mxu0 0.0
        %810 = vmatpush.msra.mxu0 0.0
        %811 = vmatpush.msra.mxu0 %v793
        %812 = vmatpush.msra.mxu0 %v792
        %813 = vmatmul.f32.gmra.mxu0 %v606
        %v814 = vpop.f32.mrf.mxu0
        %v815 = vadd.f32 0.0, %v814
        %816 = vmatmul.f32.gmra.mxu0 %v609
        %v817 = vpop.f32.mrf.mxu0
        %v818 = vadd.f32 0.0, %v817
        %819 = vmatmul.f32.gmra.mxu0 %v612
        %v820 = vpop.f32.mrf.mxu0
        %v821 = vadd.f32 0.0, %v820
        %822 = vmatmul.f32.gmra.mxu0 %v615
        %v823 = vpop.f32.mrf.mxu0
        %v824 = vadd.f32 0.0, %v823
        %825 = vmatmul.f32.gmra.mxu0 %v618
        %v826 = vpop.f32.mrf.mxu0
        %v827 = vadd.f32 0.0, %v826
        %828 = vmatmul.f32.gmra.mxu0 %v621
        %v829 = vpop.f32.mrf.mxu0
        %v830 = vadd.f32 0.0, %v829
        %831 = vmatmul.f32.gmra.mxu0 %v624
        %v832 = vpop.f32.mrf.mxu0
        %v833 = vadd.f32 0.0, %v832
        %834 = vmatmul.f32.gmra.mxu0 %v795
        %v835 = vpop.f32.mrf.mxu0
        %v836 = vadd.f32 0.0, %v835
        %837 = vdwg.mxu0
        %v838 = vadd.f32 %v783, %v815
        %v839 = vadd.f32 %v784, %v818
        %v840 = vadd.f32 %v785, %v821
        %v841 = vadd.f32 %v786, %v824
        %v842 = vadd.f32 %v787, %v827
        %v843 = vadd.f32 %v788, %v830
        %v844 = vadd.f32 %v789, %v833
        %v845 = vadd.f32 %v790, %v836
        %v847 = vrot.slane %v393, 7
        %v849 = vsel %vm419, 0.0, %v847
        %v850 = vrot.slane %v393, 1
        %v852 = vsel %vm444, %v850, 0.0
        %s853 = scalar_lea.vmem %s3, 96
        %v854 = vld [vmem:[%s853] sm:$0xff]
        %v855 = vld [vmem:[%s853 + $0x8] sm:$0xff]
        %v857 = vsel %vm373, %v849, 0
        %859 = vmatpush.msra.mxu0 0.0
        %860 = vmatpush.msra.mxu0 0.0
        %861 = vmatpush.msra.mxu0 0.0
        %862 = vmatpush.msra.mxu0 0.0
        %863 = vmatpush.msra.mxu0 0.0
        %864 = vmatpush.msra.mxu0 0.0
        %865 = vmatpush.msra.mxu0 0.0
        %866 = vmatpush.msra.mxu0 0.0
        %867 = vmatpush.msra.mxu0 0.0
        %868 = vmatpush.msra.mxu0 0.0
        %869 = vmatpush.msra.mxu0 0.0
        %870 = vmatpush.msra.mxu0 0.0
        %871 = vmatpush.msra.mxu0 0.0
        %872 = vmatpush.msra.mxu0 0.0
        %873 = vmatpush.msra.mxu0 %v855
        %874 = vmatpush.msra.mxu0 %v854
        %875 = vmatmul.f32.gmra.mxu0 %v462
        %v876 = vpop.f32.mrf.mxu0
        %v877 = vadd.f32 0.0, %v876
        %878 = vmatmul.f32.gmra.mxu0 %v465
        %v879 = vpop.f32.mrf.mxu0
        %v880 = vadd.f32 0.0, %v879
        %881 = vmatmul.f32.gmra.mxu0 %v468
        %v882 = vpop.f32.mrf.mxu0
        %v883 = vadd.f32 0.0, %v882
        %884 = vmatmul.f32.gmra.mxu0 %v471
        %v885 = vpop.f32.mrf.mxu0
        %v886 = vadd.f32 0.0, %v885
        %887 = vmatmul.f32.gmra.mxu0 %v474
        %v888 = vpop.f32.mrf.mxu0
        %v889 = vadd.f32 0.0, %v888
        %890 = vmatmul.f32.gmra.mxu0 %v477
        %v891 = vpop.f32.mrf.mxu0
        %v892 = vadd.f32 0.0, %v891
        %893 = vmatmul.f32.gmra.mxu0 %v686
        %v894 = vpop.f32.mrf.mxu0
        %v895 = vadd.f32 0.0, %v894
        %896 = vmatmul.f32.gmra.mxu0 %v857
        %v897 = vpop.f32.mrf.mxu0
        %v898 = vadd.f32 0.0, %v897
        %899 = vdwg.mxu0
        %v900 = vadd.f32 %v838, %v877
        %v901 = vadd.f32 %v839, %v880
        %v902 = vadd.f32 %v840, %v883
        %v903 = vadd.f32 %v841, %v886
        %v904 = vadd.f32 %v842, %v889
        %v905 = vadd.f32 %v843, %v892
        %v906 = vadd.f32 %v844, %v895
        %v907 = vadd.f32 %v845, %v898
        %s908 = scalar_lea.vmem %s3, 112
        %v909 = vld [vmem:[%s908] sm:$0xff]
        %v910 = vld [vmem:[%s908 + $0x8] sm:$0xff]
        %v911 = vsel %vm373, %v393, 0
        %913 = vmatpush.msra.mxu0 0.0
        %914 = vmatpush.msra.mxu0 0.0
        %915 = vmatpush.msra.mxu0 0.0
        %916 = vmatpush.msra.mxu0 0.0
        %917 = vmatpush.msra.mxu0 0.0
        %918 = vmatpush.msra.mxu0 0.0
        %919 = vmatpush.msra.mxu0 0.0
        %920 = vmatpush.msra.mxu0 0.0
        %921 = vmatpush.msra.mxu0 0.0
        %922 = vmatpush.msra.mxu0 0.0
        %923 = vmatpush.msra.mxu0 0.0
        %924 = vmatpush.msra.mxu0 0.0
        %925 = vmatpush.msra.mxu0 0.0
        %926 = vmatpush.msra.mxu0 0.0
        %927 = vmatpush.msra.mxu0 %v910
        %928 = vmatpush.msra.mxu0 %v909
        %929 = vmatmul.f32.gmra.mxu0 %v538
        %v930 = vpop.f32.mrf.mxu0
        %v931 = vadd.f32 0.0, %v930
        %932 = vmatmul.f32.gmra.mxu0 %v540
        %v933 = vpop.f32.mrf.mxu0
        %v934 = vadd.f32 0.0, %v933
        %935 = vmatmul.f32.gmra.mxu0 %v542
        %v936 = vpop.f32.mrf.mxu0
        %v937 = vadd.f32 0.0, %v936
        %938 = vmatmul.f32.gmra.mxu0 %v544
        %v939 = vpop.f32.mrf.mxu0
        %v940 = vadd.f32 0.0, %v939
        %941 = vmatmul.f32.gmra.mxu0 %v546
        %v942 = vpop.f32.mrf.mxu0
        %v943 = vadd.f32 0.0, %v942
        %944 = vmatmul.f32.gmra.mxu0 %v548
        %v945 = vpop.f32.mrf.mxu0
        %v946 = vadd.f32 0.0, %v945
        %947 = vmatmul.f32.gmra.mxu0 %v740
        %v948 = vpop.f32.mrf.mxu0
        %v949 = vadd.f32 0.0, %v948
        %950 = vmatmul.f32.gmra.mxu0 %v911
        %v951 = vpop.f32.mrf.mxu0
        %v952 = vadd.f32 0.0, %v951
        %953 = vdwg.mxu0
        %v954 = vadd.f32 %v900, %v931
        %v955 = vadd.f32 %v901, %v934
        %v956 = vadd.f32 %v902, %v937
        %v957 = vadd.f32 %v903, %v940
        %v958 = vadd.f32 %v904, %v943
        %v959 = vadd.f32 %v905, %v946
        %v960 = vadd.f32 %v906, %v949
        %v961 = vadd.f32 %v907, %v952
        %s962 = scalar_lea.vmem %s3, 128
        %v963 = vld [vmem:[%s962] sm:$0xff]
        %v964 = vld [vmem:[%s962 + $0x8] sm:$0xff]
        %v966 = vsel %vm373, %v852, 0
        %968 = vmatpush.msra.mxu0 0.0
        %969 = vmatpush.msra.mxu0 0.0
        %970 = vmatpush.msra.mxu0 0.0
        %971 = vmatpush.msra.mxu0 0.0
        %972 = vmatpush.msra.mxu0 0.0
        %973 = vmatpush.msra.mxu0 0.0
        %974 = vmatpush.msra.mxu0 0.0
        %975 = vmatpush.msra.mxu0 0.0
        %976 = vmatpush.msra.mxu0 0.0
        %977 = vmatpush.msra.mxu0 0.0
        %978 = vmatpush.msra.mxu0 0.0
        %979 = vmatpush.msra.mxu0 0.0
        %980 = vmatpush.msra.mxu0 0.0
        %981 = vmatpush.msra.mxu0 0.0
        %982 = vmatpush.msra.mxu0 %v964
        %983 = vmatpush.msra.mxu0 %v963
        %984 = vmatmul.f32.gmra.mxu0 %v609
        %v985 = vpop.f32.mrf.mxu0
        %v986 = vadd.f32 0.0, %v985
        %987 = vmatmul.f32.gmra.mxu0 %v612
        %v988 = vpop.f32.mrf.mxu0
        %v989 = vadd.f32 0.0, %v988
        %990 = vmatmul.f32.gmra.mxu0 %v615
        %v991 = vpop.f32.mrf.mxu0
        %v992 = vadd.f32 0.0, %v991
        %993 = vmatmul.f32.gmra.mxu0 %v618
        %v994 = vpop.f32.mrf.mxu0
        %v995 = vadd.f32 0.0, %v994
        %996 = vmatmul.f32.gmra.mxu0 %v621
        %v997 = vpop.f32.mrf.mxu0
        %v998 = vadd.f32 0.0, %v997
        %999 = vmatmul.f32.gmra.mxu0 %v624
        %v1000 = vpop.f32.mrf.mxu0
        %v1001 = vadd.f32 0.0, %v1000
        %1002 = vmatmul.f32.gmra.mxu0 %v795
        %v1003 = vpop.f32.mrf.mxu0
        %v1004 = vadd.f32 0.0, %v1003
        %1005 = vmatmul.f32.gmra.mxu0 %v966
        %v1006 = vpop.f32.mrf.mxu0
        %v1007 = vadd.f32 0.0, %v1006
        %1008 = vdwg.mxu0
        %v1009 = vadd.f32 %v954, %v986
        %v1010 = vadd.f32 %v955, %v989
        %v1011 = vadd.f32 %v956, %v992
        %v1012 = vadd.f32 %v957, %v995
        %v1013 = vadd.f32 %v958, %v998
        %v1014 = vadd.f32 %v959, %v1001
        %v1015 = vadd.f32 %v960, %v1004
        %v1016 = vadd.f32 %v961, %v1007
        %vm1017 = vcmask 64512
        %1018 = vst.msk [vmem:[%s352] sm:$0xff] %vm1017, %v1009
        %1019 = vst.msk [vmem:[%s352 + $0x8] sm:$0xff] %vm1017, %v1010
        %1020 = vst.msk [vmem:[%s352 + $0x10] sm:$0xff] %vm1017, %v1011
        %1021 = vst.msk [vmem:[%s352 + $0x18] sm:$0xff] %vm1017, %v1012
        %1022 = vst.msk [vmem:[%s352 + $0x20] sm:$0xff] %vm1017, %v1013
        %1023 = vst.msk [vmem:[%s352 + $0x28] sm:$0xff] %vm1017, %v1014
        %1024 = vst.msk [vmem:[%s352 + $0x30] sm:$0xff] %vm1017, %v1015
        %1025 = vst.msk [vmem:[%s352 + $0x38] sm:$0xff] %vm1017, %v1016
        %s1026 = sand.u32 %s189, 1
        %s1027 = scalar_lea.sflag [#allocation5], %s1026
        %s1028 = sand.u32 %s189, 1
        %s1029 = smul.addr %s1028, 64
        %s1030 = scalar_lea.vmem [#allocation8], %s1029
        // Predicated region
        $region53: #{tpu_custom_call.1} parent=39 // pred_check
          %p1031 = pneg %p199
        $region54: #{tpu_custom_call.1} parent=39 // pred_check_branch
          %1033 = sbr.rel (%p1031) target = $region56
        $region55: #{tpu_custom_call.1} parent=39 // pred_region
          %s1034 = smul.u32 8, %s30
          %1036 = vsyncadd %s1027, 0
          %s1037 = smul.addr %s29, 8
          %s1038 = sadd.s32 %s1034, %s1037
          %s1039 = smul.addr %s1038, 8
          %s1040 = scalar_lea.hbm %s5, %s1039
          %s1041 = sshll.u32 %s1030, 4
          %s1042 = int_to_ptr.vmem [resolvable:$true] %s1041
          %s1043 = sshll.u32 %s1040, 4
          %s1044 = int_to_ptr.hbm [resolvable:$true] %s1043
          %1049 = dma.vmem_to_hbm [thread:$0]  %s1042, 1024, %s1044, %s1027, 128, 128, 8
        $region56: #{tpu_custom_call.1} parent=39 // pred_fallthru
          _
      $region40: #{tpu_custom_call.1} parent=5 // pred_fallthru
        _
      %p1050 = scmp.le.s32.totalorder 2, %s20
      // Predicated region
      $region57: #{tpu_custom_call.1} parent=5 // pred_check
        %p1051 = pneg %p1050
      $region58: #{tpu_custom_call.1} parent=5 // pred_check_branch
        %1053 = sbr.rel (%p1051) target = $region60
      $region59: #{tpu_custom_call.1} parent=5 // pred_region
        %s1054 = ssub.s32 %s20, 2
        // Predicated region
        $region61: #{tpu_custom_call.1} parent=59 // pred_check
          %p1055 = pneg %p205
        $region62: #{tpu_custom_call.1} parent=59 // pred_check_branch
          %1057 = sbr.rel (%p1055) target = $region64
        $region63: #{tpu_custom_call.1} parent=59 // pred_region
          %s1058 = sand.u32 %s190, 1
          %s1059 = scalar_lea.sflag [#allocation5], %s1058
          %s1060 = sand.u32 %s190, 1
          %s1061 = smul.addr %s1060, 64
          %s1062 = scalar_lea.vmem [#allocation8], %s1061
          %1064 = dma.done %s1059, 1024
        $region64: #{tpu_custom_call.1} parent=59 // pred_fallthru
          _
      $region60: #{tpu_custom_call.1} parent=5 // pred_fallthru
        _
    $region6: #{tpu_custom_call.1} parent=1 // loop_footer
      %s24 = sadd.s32 1, %s20
    $region7: #{tpu_custom_call.1} parent=1 // loop_footer_branch
      %19 = sbr.rel target = $region3
    $region8: #{tpu_custom_call.1} parent=1 // loop_exit
      _
    %1065 = vsyncpa [#allocation4], 1
    %s1066 = scalar_lea.sflag [#allocation4], 1
    %1067 = vsyncpa %s1066, 1
    %1068 = vsyncpa [#allocation7], 1
    %s1069 = scalar_lea.sflag [#allocation7], 1
    %1070 = vsyncpa %s1069, 1
    %1071 = vsyncpa [#allocation5], 1
    %s1072 = scalar_lea.sflag [#allocation5], 1
    %1073 = vsyncpa %s1072, 1

</llo_original>
